<compile_context>
chip_gen: v7x
topology: tpu7x:2x2x1
jax: 0.10.0
libtpu: 0.0.40
codegen_flags: <defaults>
</compile_context>

<pallas_src>
import math

import jax
import jax.numpy as jnp
from jax.experimental import pallas as pl
from jax.experimental.pallas import tpu as pltpu


# --------------------------------------------------------------------------- #
# helpers
# --------------------------------------------------------------------------- #
def _pick_tile(dim, candidates):
    """Largest candidate tile that divides `dim`; else fall back to the full
    dim (full-dim blocks always satisfy the (8,128) BlockSpec rule)."""
    for t in candidates:
        if dim >= t and dim % t == 0:
            return t
    return dim


def _vmem_limit(block_bytes):
    """Scoped-VMEM request: double-buffered blocks + headroom, clamped to a
    range safe on v5e/v6e (128 MiB phys) and v7x (64 MiB phys per TC)."""
    need = 2 * block_bytes + (8 << 20)
    return int(min(max(need, 32 << 20), 64 << 20))


# --------------------------------------------------------------------------- #
# tiled linear:  y = x @ W^T   (PyTorch nn.Linear(bias=False), W is (N, K))
# --------------------------------------------------------------------------- #
def _make_matmul_kernel(mxu_dtype):
    cast = (lambda a: a.astype(mxu_dtype)) if mxu_dtype is not None else (lambda a: a)

    def kernel(x_ref, w_ref, o_ref, acc_ref):
        # x: (tm, tk), w: (tn, tk), o: (tm, tn), acc: (tm, tn) f32
        @pl.when(pl.program_id(2) == 0)
        def _init():
            acc_ref[...] = jnp.zeros_like(acc_ref)

        # contract on the K axis of both operands -> no materialized W^T.
        acc_ref[...] += jax.lax.dot_general(
            cast(x_ref[...]), cast(w_ref[...]),
            (((1,), (1,)), ((), ())),
            preferred_element_type=jnp.float32)

        @pl.when(pl.program_id(2) == pl.num_programs(2) - 1)
        def _flush():
            o_ref[...] = acc_ref[...].astype(o_ref.dtype)

    return kernel


def linear(x, w, *, mxu_dtype=None):
    """x: (..., K) ; w: (N, K) PyTorch-style weight. Returns x @ w.T, shape (..., N)."""
    *lead, K = x.shape
    N, Kw = w.shape
    assert K == Kw, "weight in_features mismatch"
    M = int(math.prod(lead)) if lead else 1
    x2 = x.reshape(M, K)

    tm = _pick_tile(M, (256, 128))
    tn = _pick_tile(N, (256, 128))
    tk = _pick_tile(K, (512, 256, 128))
    grid = (M // tm, N // tn, K // tk)

    block_bytes = 4 * (tm * tk + tn * tk + 2 * tm * tn)
    out = pl.pallas_call(
        _make_matmul_kernel(mxu_dtype),
        out_shape=jax.ShapeDtypeStruct((M, N), x.dtype),
        grid=grid,
        in_specs=[
            pl.BlockSpec((tm, tk), lambda i, j, k: (i, k)),
            pl.BlockSpec((tn, tk), lambda i, j, k: (j, k)),
        ],
        out_specs=pl.BlockSpec((tm, tn), lambda i, j, k: (i, j)),
        scratch_shapes=[pltpu.VMEM((tm, tn), jnp.float32)],
        compiler_params=pltpu.CompilerParams(
            dimension_semantics=("parallel", "parallel", "arbitrary"),
            vmem_limit_bytes=_vmem_limit(block_bytes)),
    )(x2, w)
    return out.reshape(*lead, N)


# --------------------------------------------------------------------------- #
# attention kernel: all heads per (batch, q-tile) block, no transposes
# --------------------------------------------------------------------------- #
def _make_attn_kernel(n_head, d_k, q_off, k_off, v_off, inv_scale, mxu_dtype):
    cast = (lambda a: a.astype(mxu_dtype)) if mxu_dtype is not None else (lambda a: a)

    def kernel(q_ref, kv_ref, mask_ref, ctx_ref, score_ref):
        # q_ref:    (tq, Wq)        -- q columns start at q_off
        # kv_ref:   (Skv, Wkv)      -- k/v columns start at k_off / v_off
        # mask_ref: (tq, Skv) int   -- 0 == masked
        # ctx_ref:  (tq, D)         -- per-head ctx written into columns h*d_k
        # score_ref:(n_head, tq, Skv)
        q_all = q_ref[...]
        kv_all = kv_ref[...]
        masked = mask_ref[...] == 0
        neg = jnp.float32(-1e9)

        ctx_cols = []
        for h in range(n_head):  # n_head is a small compile-time constant
            qh = q_all[:, q_off + h * d_k: q_off + (h + 1) * d_k] * inv_scale
            kh = kv_all[:, k_off + h * d_k: k_off + (h + 1) * d_k]
            vh = kv_all[:, v_off + h * d_k: v_off + (h + 1) * d_k]

            # QK^T via dot_general contracting last dims (no VMEM transpose).
            logits = jax.lax.dot_general(
                cast(qh), cast(kh), (((1,), (1,)), ((), ())),
                preferred_element_type=jnp.float32)
            logits = jnp.where(masked, neg, logits)

            # numerically stable softmax, all in f32
            logits = logits - jnp.max(logits, axis=-1, keepdims=True)
            p = jnp.exp(logits)
            attn = p * pl.reciprocal(jnp.sum(p, axis=-1, keepdims=True), approx=True)

            score_ref[h] = attn.astype(score_ref.dtype)
            # dropout(attn) == attn in eval mode
            ctx_cols.append(jnp.dot(cast(attn), cast(vh),
                                    preferred_element_type=jnp.float32))

        # single lane-dense (tq, D) store == "merge heads" with no transpose.
        ctx_ref[...] = jnp.concatenate(ctx_cols, axis=-1).astype(ctx_ref.dtype)

    return kernel


def _attention(q_src, kv_src, mask, *, n_head, d_k, q_off, k_off, v_off,
               scale, out_dtype, mxu_dtype):
    B, Sq, Wq = q_src.shape
    Skv, Wkv = kv_src.shape[1], kv_src.shape[2]
    D = n_head * d_k
    tq = _pick_tile(Sq, (256, 128))
    mb = 0 if mask.shape[0] == 1 else 1  # batch-broadcast mask support

    block_bytes = 4 * (tq * Wq + Skv * Wkv + tq * Skv + tq * D + n_head * tq * Skv)
    kernel = _make_attn_kernel(n_head, d_k, q_off, k_off, v_off, 1.0 / scale, mxu_dtype)

    ctx, score = pl.pallas_call(
        kernel,
        out_shape=(
            jax.ShapeDtypeStruct((B, Sq, D), out_dtype),
            jax.ShapeDtypeStruct((B, n_head, Sq, Skv), jnp.float32),
        ),
        grid=(B, Sq // tq),
        in_specs=[
            pl.BlockSpec((None, tq, Wq), lambda b, qi: (b, qi, 0)),
            pl.BlockSpec((None, Skv, Wkv), lambda b, qi: (b, 0, 0)),
            pl.BlockSpec((None, None, tq, Skv), lambda b, qi: (b * mb, 0, qi, 0)),
        ],
        out_specs=(
            pl.BlockSpec((None, tq, D), lambda b, qi: (b, qi, 0)),
            pl.BlockSpec((None, n_head, tq, Skv), lambda b, qi: (b, 0, qi, 0)),
        ),
        compiler_params=pltpu.CompilerParams(
            dimension_semantics=("parallel", "parallel"),
            vmem_limit_bytes=_vmem_limit(block_bytes)),
    )(q_src, kv_src, mask)
    return ctx, score


# --------------------------------------------------------------------------- #
# full module forward
# --------------------------------------------------------------------------- #
def multi_head_attention(query, key, value, mask, params, n_head, *, mxu_dtype=None):
    """query: (B, Sq, D), key/value: (B, Skv, D), mask: (B or 1, 1, Sq, Skv).
    Returns (output (B, Sq, D), attention_score (B, n_head, Sq, Skv))."""
    B, Sq, D = query.shape
    Skv = key.shape[1]
    assert D % n_head == 0
    d_k = D // n_head
    scale = math.sqrt(d_k)

    if query is key and key is value:
        # self-attention: one fused (3D, D) projection -> (B, S, 3D) slab.
        # (In a real model pre-concatenate the weight once at init.)
        w_qkv = jnp.concatenate([params["wq"], params["wk"], params["wv"]], axis=0)
        qkv = linear(query, w_qkv, mxu_dtype=mxu_dtype)
        q_src, kv_src = qkv, qkv
        q_off, k_off, v_off = 0, D, 2 * D
    else:
        q_src = linear(query, params["wq"], mxu_dtype=mxu_dtype)
        if key is value:
            w_kv = jnp.concatenate([params["wk"], params["wv"]], axis=0)
            kv_src = linear(key, w_kv, mxu_dtype=mxu_dtype)
        else:
            k_p = linear(key, params["wk"], mxu_dtype=mxu_dtype)
            v_p = linear(value, params["wv"], mxu_dtype=mxu_dtype)
            kv_src = jnp.concatenate([k_p, v_p], axis=-1)  # rare cross-attn case
        q_off, k_off, v_off = 0, 0, D

    if mask is None:
        mask = jnp.ones((1, 1, Sq, Skv), jnp.int32)
    assert mask.ndim == 4 and mask.shape[1] == 1, "mask must be (B or 1, 1, Sq, Skv)"
    assert mask.shape[2] == Sq and mask.shape[3] == Skv

    ctx, score = _attention(
        q_src, kv_src, mask, n_head=n_head, d_k=d_k,
        q_off=q_off, k_off=k_off, v_off=v_off,
        scale=scale, out_dtype=query.dtype, mxu_dtype=mxu_dtype)

    out = linear(ctx, params["wd"], mxu_dtype=mxu_dtype)
    return out, score


# --------------------------------------------------------------------------- #
# pure-JAX reference (mirrors the PyTorch module)
# --------------------------------------------------------------------------- #
def reference(query, key, value, mask, params, n_head):
    B, Sq, D = query.shape
    d_k = D // n_head
    split = lambda x: x.reshape(x.shape[0], x.shape[1], n_head, d_k).transpose(0, 2, 1, 3)
    Q = split(query @ params["wq"].T)
    K = split(key @ params["wk"].T)
    V = split(value @ params["wv"].T)
    logits = (Q @ K.transpose(0, 1, 3, 2)) / math.sqrt(d_k)
    logits = jnp.where(mask == 0, -1e9, logits)
    attn = jax.nn.softmax(logits, axis=-1)
    ctx = attn @ V
    concat = ctx.transpose(0, 2, 1, 3).reshape(B, Sq, D)
    return concat @ params["wd"].T, attn


# --------------------------------------------------------------------------- #
# main
# --------------------------------------------------------------------------- #
if __name__ == "__main__":
    def make_params(key, d_model):
        lim = 1.0 / math.sqrt(d_model)
        names = ("wq", "wk", "wv", "wd")
        return {n: jax.random.uniform(k, (d_model, d_model), jnp.float32, -lim, lim)
                for n, k in zip(names, jax.random.split(key, 4))}

    def check(B, S, d_model, n_head, *, self_attn, bcast_mask, mxu_dtype=None,
              atol=5e-3, rtol=5e-3, seed=0):
        kq, kk, kv, kp = jax.random.split(jax.random.PRNGKey(seed), 4)
        params = make_params(kp, d_model)
        if self_attn:
            x = jax.random.normal(kq, (B, S, d_model), jnp.float32)
            q = k = v = x
        else:
            q = jax.random.normal(kq, (B, S, d_model), jnp.float32)
            k = jax.random.normal(kk, (B, S, d_model), jnp.float32)
            v = jax.random.normal(kv, (B, S, d_model), jnp.float32)
        causal = jnp.tril(jnp.ones((S, S), jnp.int32))[None, None]   # (1,1,S,S)
        mask = causal if bcast_mask else jnp.broadcast_to(causal, (B, 1, S, S))

        out, score = multi_head_attention(q, k, v, mask, params, n_head,
                                          mxu_dtype=mxu_dtype)
        out = jax.block_until_ready(out)
        score = jax.block_until_ready(score)

        ref_out, ref_score = reference(q, k, v, mask, params, n_head)
        assert out.shape == ref_out.shape and score.shape == ref_score.shape
        assert jnp.allclose(out, ref_out, atol=atol, rtol=rtol), \
            f"output mismatch: max err {jnp.max(jnp.abs(out - ref_out)):.3e}"
        assert jnp.allclose(score, ref_score, atol=atol, rtol=rtol), \
            f"score mismatch: max err {jnp.max(jnp.abs(score - ref_score)):.3e}"

    # 1) toy self-attention (fused QKV path, full-dim blocks)
    check(2, 8, 32, 4, self_attn=True, bcast_mask=False)
    # 2) toy with distinct q/k/v tensors and a batch-broadcast (1,1,S,S) mask
    check(2, 8, 32, 4, self_attn=False, bcast_mask=True, seed=1)
    # 3) 128-aligned shapes: exercises tiled matmul (multi-step K reduction)
    #    and the q-tiled attention path
    check(1, 256, 1024, 8, self_attn=True, bcast_mask=False, seed=2)
    # 4) bf16 MXU operands (v6e/v7x path), f32 softmax/accumulation
    check(2, 8, 32, 4, self_attn=True, bcast_mask=False,
          mxu_dtype=jnp.bfloat16, atol=1e-1, rtol=1e-1, seed=3)

    print("KERNEL_OK")
</pallas_src>

<mosaic_0001>
module attributes {stable_mosaic.version = 11 : i64} {
  func.func @kernel(%arg0: i32, %arg1: i32, %arg2: i32, %arg3: memref<16x32xf32, #tpu.memory_space<vmem>>, %arg4: memref<96x32xf32, #tpu.memory_space<vmem>>, %arg5: memref<16x96xf32, #tpu.memory_space<vmem>>, %arg6: memref<16x96xf32, #tpu.memory_space<vmem>>) attributes {dimension_semantics = [#tpu.dimension_semantics<parallel>, #tpu.dimension_semantics<parallel>, #tpu.dimension_semantics<arbitrary>], iteration_bounds = array<i64: 1, 1, 1>, scalar_prefetch = 0 : i64, scratch_operands = 1 : i64, tpu.core_type = #tpu.core_type<tc>, window_params = [{transform_indices = @transform_0, window_bounds = array<i64: 16, 32>}, {transform_indices = @transform_1, window_bounds = array<i64: 96, 32>}, {transform_indices = @transform_2, window_bounds = array<i64: 16, 96>}]} {
    %c0_i32 = arith.constant 0 : i32
    %0 = arith.cmpi eq, %arg2, %c0_i32 : i32
    %1 = arith.extui %0 : i1 to i32
    %c0_i32_0 = arith.constant 0 : i32
    %2 = arith.cmpi ne, %1, %c0_i32_0 : i32
    scf.if %2 {
      %cst_10 = arith.constant 0.000000e+00 : f32
      %12 = vector.broadcast %cst_10 : f32 to vector<16x96xf32>
      %c0_11 = arith.constant 0 : index
      %c0_12 = arith.constant 0 : index
      %13 = vector.load %arg6[%c0_11, %c0_12] : memref<16x96xf32, #tpu.memory_space<vmem>>, vector<16x96xf32>
      tpu.vector_store %arg6[%c0_11, %c0_12], %12 {strides = array<i32>} : memref<16x96xf32, #tpu.memory_space<vmem>>, vector<16x96xf32>,
    } else {
    }
    %c0 = arith.constant 0 : index
    %c0_1 = arith.constant 0 : index
    %3 = vector.load %arg6[%c0, %c0_1] : memref<16x96xf32, #tpu.memory_space<vmem>>, vector<16x96xf32>
    %c0_2 = arith.constant 0 : index
    %c0_3 = arith.constant 0 : index
    %4 = vector.load %arg3[%c0_2, %c0_3] : memref<16x32xf32, #tpu.memory_space<vmem>>, vector<16x32xf32>
    %c0_4 = arith.constant 0 : index
    %c0_5 = arith.constant 0 : index
    %5 = vector.load %arg4[%c0_4, %c0_5] : memref<96x32xf32, #tpu.memory_space<vmem>>, vector<96x32xf32>
    %cst = arith.constant dense<0.000000e+00> : vector<16x96xf32>
    %6 = tpu.matmul %4, %5, %cst {dimension_numbers = #tpu.dot_dimension_numbers<[1], [1], [0], [0], [0, 0, 1, 0], [], []>} : vector<16x32xf32>, vector<96x32xf32>, vector<16x96xf32> -> vector<16x96xf32>
    %7 = arith.addf %3, %6 : vector<16x96xf32>
    %c0_6 = arith.constant 0 : index
    %c0_7 = arith.constant 0 : index
    %8 = vector.load %arg6[%c0_6, %c0_7] : memref<16x96xf32, #tpu.memory_space<vmem>>, vector<16x96xf32>
    tpu.vector_store %arg6[%c0_6, %c0_7], %7 {strides = array<i32>} : memref<16x96xf32, #tpu.memory_space<vmem>>, vector<16x96xf32>,
    %c0_i32_8 = arith.constant 0 : i32
    %9 = arith.cmpi eq, %arg2, %c0_i32_8 : i32
    %10 = arith.extui %9 : i1 to i32
    %c0_i32_9 = arith.constant 0 : i32
    %11 = arith.cmpi ne, %10, %c0_i32_9 : i32
    scf.if %11 {
      %c0_10 = arith.constant 0 : index
      %c0_11 = arith.constant 0 : index
      %12 = vector.load %arg6[%c0_10, %c0_11] : memref<16x96xf32, #tpu.memory_space<vmem>>, vector<16x96xf32>
      %c0_12 = arith.constant 0 : index
      %c0_13 = arith.constant 0 : index
      %13 = vector.load %arg5[%c0_12, %c0_13] : memref<16x96xf32, #tpu.memory_space<vmem>>, vector<16x96xf32>
      tpu.vector_store %arg5[%c0_12, %c0_13], %12 {strides = array<i32>} : memref<16x96xf32, #tpu.memory_space<vmem>>, vector<16x96xf32>,
    } else {
    }
    return
  }
  func.func @transform_0(%arg0: i32, %arg1: i32, %arg2: i32) -> (i32, i32) {
    %c0_i32 = arith.constant 0 : i32
    return %arg0, %arg2 : i32, i32
  }
  func.func @transform_1(%arg0: i32, %arg1: i32, %arg2: i32) -> (i32, i32) {
    %c0_i32 = arith.constant 0 : i32
    return %arg1, %arg2 : i32, i32
  }
  func.func @transform_2(%arg0: i32, %arg1: i32, %arg2: i32) -> (i32, i32) {
    %c0_i32 = arith.constant 0 : i32
    return %arg0, %arg1 : i32, i32
  }
}

</mosaic_0001>

<llo_original>
// kernel: tpu_custom_call.1
$region0: #{tpu_custom_call.1}
  #allocation0 [shape = 'u32[]', space=smem, size = 0x4, offset = 0x4, fixed_abs, tag = 'smem constant byte address 0x4 - core index']
  #allocation1 [shape = 'u32[144,128]{1,0:T(1,128)}', space=vmem, size = 0x12000, scoped, tag = 'internal scratch']
  #allocation2 [shape = 'f32[16,96]{1,0:T(8,128)}', space=vmem, size = 0x2000, scoped, tag = 'scratch operand']
  %s0 = inlined_call_operand.vmem [shape: f32[16,32], index: 0, kind: input, shape index: {}]
  %s1 = inlined_call_operand.vmem [shape: f32[96,32], index: 1, kind: input, shape index: {}]
  %s2 = inlined_call_operand.hbm [shape: f32[16,96], index: 2, kind: output, shape index: {}]
  %s3 = sld [smem:[#allocation0]]
  $region26: #{tpu_custom_call.1} parent=0
    _
  %s5 = ssub.s32 1, %s3
  %s6 = scalar_select 0, %s5, %s3
  $region1: #{tpu_custom_call.1} parent=0
    #allocation3 [shape = 'u8[8192]{0}', space=vmem, size = 0x2000, scoped, tag = 'output window, operand 0, single buffered']
    #allocation4 [shape = 's32[1]{0}', space=sflag, size = 0x4, scoped, tag = 'scoped memory for tpu_custom_call.1']
    %7 = vsyncpa [#allocation4], 0
    // Predicated region
    $region2: #{tpu_custom_call.1} parent=1 // pred_check
      _
    $region3: #{tpu_custom_call.1} parent=1 // pred_check_branch
      %9 = sbr.rel (0) target = $region5
    $region4: #{tpu_custom_call.1} parent=1 // pred_region
      _
    $region5: #{tpu_custom_call.1} parent=1 // pred_fallthru
      _
    // Predicated region
    $region6: #{tpu_custom_call.1} parent=1 // pred_check
      _
    $region7: #{tpu_custom_call.1} parent=1 // pred_check_branch
      %11 = sbr.rel (0) target = $region9
    $region8: #{tpu_custom_call.1} parent=1 // pred_region
      _
    $region9: #{tpu_custom_call.1} parent=1 // pred_fallthru
      _
    %p12 = scmp.eq.s32.totalorder 0, 0
    // Predicated region
    $region10: #{tpu_custom_call.1} parent=1 // pred_check
      %p13 = pneg %p12
    $region11: #{tpu_custom_call.1} parent=1 // pred_check_branch
      %15 = sbr.rel (%p13) target = $region13
    $region12: #{tpu_custom_call.1} parent=1 // pred_region
      %vm16 = vcmask 785408
      %17 = vst.msk [vmem:[#allocation2] sm:$0xff] %vm16, 0.0
      %18 = vst.msk [vmem:[#allocation2 + $0x8] sm:$0xff] %vm16, 0.0
    $region13: #{tpu_custom_call.1} parent=1 // pred_fallthru
      _
    %v19 = vld [vmem:[#allocation2] sm:$0xff]
    %v20 = vld [vmem:[#allocation2 + $0x8] sm:$0xff]
    %v21 = vld [vmem:[%s0] sm:$0xff]
    %v22 = vld [vmem:[%s0 + $0x8] sm:$0xff]
    %v23 = vld [vmem:[%s1] sm:$0xff]
    %v24 = vld [vmem:[%s1 + $0x8] sm:$0xff]
    %v25 = vld [vmem:[%s1 + $0x10] sm:$0xff]
    %v26 = vld [vmem:[%s1 + $0x18] sm:$0xff]
    %v27 = vld [vmem:[%s1 + $0x20] sm:$0xff]
    %v28 = vld [vmem:[%s1 + $0x28] sm:$0xff]
    %v29 = vld [vmem:[%s1 + $0x30] sm:$0xff]
    %v30 = vld [vmem:[%s1 + $0x38] sm:$0xff]
    %v31 = vld [vmem:[%s1 + $0x40] sm:$0xff]
    %v32 = vld [vmem:[%s1 + $0x48] sm:$0xff]
    %v33 = vld [vmem:[%s1 + $0x50] sm:$0xff]
    %v34 = vld [vmem:[%s1 + $0x58] sm:$0xff]
    %vm35 = vcmask 261120
    %v37 = vsel %vm35, %v21, 0
    %v40 = vsel %vm35, %v22, 0
    %v43 = vsel %vm35, %v23, 0
    %v46 = vsel %vm35, %v24, 0
    %v49 = vsel %vm35, %v25, 0
    %v52 = vsel %vm35, %v26, 0
    %v55 = vsel %vm35, %v27, 0
    %v58 = vsel %vm35, %v28, 0
    %v61 = vsel %vm35, %v29, 0
    %v64 = vsel %vm35, %v30, 0
    %v67 = vsel %vm35, %v31, 0
    %v70 = vsel %vm35, %v32, 0
    %v73 = vsel %vm35, %v33, 0
    %v76 = vsel %vm35, %v34, 0
    %78 = vmatprep.subr.mxu0 0.0
    %79 = vmatpush1.xpose.msra.mxu0 %v43
    %80 = vmatprep.subr.mxu0 0.0
    %81 = vmatpush1.xpose.msra.mxu0 %v46
    %82 = vmatprep.subr.mxu0 0.0
    %83 = vmatpush1.xpose.msra.mxu0 %v49
    %84 = vmatprep.subr.mxu0 0.0
    %85 = vmatpush1.xpose.msra.mxu0 %v52
    %86 = vmatprep.subr.mxu0 0.0
    %87 = vmatpush1.xpose.msra.mxu0 %v55
    %88 = vmatprep.subr.mxu0 0.0
    %89 = vmatpush1.xpose.msra.mxu0 %v58
    %90 = vmatprep.subr.mxu0 0.0
    %91 = vmatpush1.xpose.msra.mxu0 %v61
    %92 = vmatprep.subr.mxu0 0.0
    %93 = vmatpush1.xpose.msra.mxu0 %v64
    %94 = vmatprep.subr.mxu0 0.0
    %95 = vmatpush1.xpose.msra.mxu0 %v67
    %96 = vmatprep.subr.mxu0 0.0
    %97 = vmatpush1.xpose.msra.mxu0 %v70
    %98 = vmatprep.subr.mxu0 0.0
    %99 = vmatpush1.xpose.msra.mxu0 %v73
    %100 = vmatprep.subr.mxu0 0.0
    %101 = vmatpush1.xpose.msra.mxu0 %v76
    %102 = vmatprep.subr.mxu0 0.0
    %103 = vmatpush1.xpose.msra.mxu0 0.0
    %104 = vmatprep.subr.mxu0 0.0
    %105 = vmatpush1.xpose.msra.mxu0 0.0
    %106 = vmatprep.subr.mxu0 0.0
    %107 = vmatpush1.xpose.msra.mxu0 0.0
    %108 = vmatprep.subr.mxu0 0.0
    %109 = vmatpush1.xpose.msra.mxu0 0.0
    %110 = vmatprep.subr.mxu0 0.0
    %111 = vmatpush1.xpose.msra.mxu0 0.0
    %112 = vmatprep.subr.mxu0 0.0
    %113 = vmatpush1.xpose.msra.mxu0 0.0
    %114 = vmatprep.subr.mxu0 0.0
    %115 = vmatpush1.xpose.msra.mxu0 0.0
    %116 = vmatprep.subr.mxu0 0.0
    %117 = vmatpush1.xpose.msra.mxu0 0.0
    %118 = vmatprep.subr.mxu0 0.0
    %119 = vmatpush1.xpose.msra.mxu0 0.0
    %120 = vmatprep.subr.mxu0 0.0
    %121 = vmatpush1.xpose.msra.mxu0 0.0
    %122 = vmatprep.subr.mxu0 0.0
    %123 = vmatpush1.xpose.msra.mxu0 0.0
    %124 = vmatprep.subr.mxu0 0.0
    %125 = vmatpush1.xpose.msra.mxu0 0.0
    %126 = vmatprep.subr.mxu0 0.0
    %127 = vmatpush1.xpose.msra.mxu0 0.0
    %128 = vmatprep.subr.mxu0 0.0
    %129 = vmatpush1.xpose.msra.mxu0 0.0
    %130 = vmatprep.subr.mxu0 0.0
    %131 = vmatpush1.xpose.msra.mxu0 0.0
    %132 = vmatprep.subr.mxu0 0.0
    %133 = vmatpush1.xpose.msra.mxu0 0.0
    %134 = vmatprep.subr.mxu0 0.0
    %135 = vmatpush1.xpose.msra.mxu0 0.0
    %136 = vmatprep.subr.mxu0 0.0
    %137 = vmatpush1.xpose.msra.mxu0 0.0
    %138 = vmatprep.subr.mxu0 0.0
    %139 = vmatpush1.xpose.msra.mxu0 0.0
    %140 = vmatprep.subr.mxu0 0.0
    %141 = vmatpush1.xpose.msra.mxu0 0.0
    %142 = vmatprep.mubr.f32.mxu0 0.0
    %143 = vmatmul.mubr.f32.gmra.mrb[0].mxu0 %v37
    %v144 = vpop.f32.mrb[0].mxu0
    %v145 = vadd.f32 0.0, %v144
    %v146 = vpop.f32.mrb[0].mxu0
    %147 = vmatprep.mubr.f32.mxu0 0.0
    %148 = vmatmul.mubr.f32.gmra.mrb[0].mxu0 %v40
    %v149 = vpop.f32.mrb[0].mxu0
    %v150 = vadd.f32 0.0, %v149
    %v151 = vpop.f32.mrb[0].mxu0
    %152 = vdwg.mxu0
    %v153 = vadd.f32 %v19, %v145
    %v154 = vadd.f32 %v20, %v150
    %vm155 = vcmask 785408
    %156 = vst.msk [vmem:[#allocation2] sm:$0xff] %vm155, %v153
    %157 = vst.msk [vmem:[#allocation2 + $0x8] sm:$0xff] %vm155, %v154
    // Predicated region
    $region14: #{tpu_custom_call.1} parent=1 // pred_check
      %p158 = pneg %p12
    $region15: #{tpu_custom_call.1} parent=1 // pred_check_branch
      %160 = sbr.rel (%p158) target = $region17
    $region16: #{tpu_custom_call.1} parent=1 // pred_region
      %v161 = vld [vmem:[#allocation2] sm:$0xff]
      %v162 = vld [vmem:[#allocation2 + $0x8] sm:$0xff]
      %163 = vst.msk [vmem:[#allocation3] sm:$0xff] %vm155, %v161
      %164 = vst.msk [vmem:[#allocation3 + $0x8] sm:$0xff] %vm155, %v162
    $region17: #{tpu_custom_call.1} parent=1 // pred_fallthru
      _
    // Predicated region
    $region18: #{tpu_custom_call.1} parent=1 // pred_check
      _
    $region19: #{tpu_custom_call.1} parent=1 // pred_check_branch
      %166 = sbr.rel (0) target = $region21
    $region20: #{tpu_custom_call.1} parent=1 // pred_region
      %s168 = ssub.s32 256, 256
      %169 = vsyncadd [#allocation4], %s168
      %s170 = sshll.u32 [#allocation3], 4
      %s171 = int_to_ptr.vmem [resolvable:$true] %s170
      %176 = dma.vmem_to_hbm [thread:$0]  %s171, 256, %s2, [#allocation4], 128, 128, 8
    $region21: #{tpu_custom_call.1} parent=1 // pred_fallthru
      _
    // Predicated region
    $region22: #{tpu_custom_call.1} parent=1 // pred_check
      _
    $region23: #{tpu_custom_call.1} parent=1 // pred_check_branch
      %178 = sbr.rel (0) target = $region25
    $region24: #{tpu_custom_call.1} parent=1 // pred_region
      %179 = dma.done [#allocation4], 256
    $region25: #{tpu_custom_call.1} parent=1 // pred_fallthru
      _
    %180 = vsyncpa [#allocation4], 1

</llo_original>
